<compile_context>
chip_gen: v7x
topology: tpu7x:2x2x1
jax: 0.10.0
libtpu: 0.0.40
codegen_flags: <defaults>
</compile_context>

<pallas_src>
import math
import functools

import jax
import jax.numpy as jnp
from jax.experimental import pallas as pl
from jax.experimental.pallas import tpu as pltpu


PATCH = 16
VMEM_LIMIT = 64 * 1024 * 1024   # safe upper bound on all of v5e/v6e/v7x


# ------------------------------ small helpers -------------------------------

def _round_up(a, b):
    return (a + b - 1) // b * b


def _pick_tile(n, target):
    """Largest divisor of n that is <= target (n itself if n <= target)."""
    if n <= target:
        return n
    for t in range(target, 0, -1):
        if n % t == 0:
            return t
    return n


# ----------------------------- Pallas kernels ------------------------------

def _matmul_kernel(x_ref, w_ref, b_ref, o_ref, acc_ref):
    """Tiled x @ w + b with f32 accumulator; bf16 MXU operands."""
    @pl.when(pl.program_id(2) == 0)
    def _():
        acc_ref[...] = jnp.zeros_like(acc_ref)

    acc_ref[...] += jnp.dot(
        x_ref[...].astype(jnp.bfloat16),
        w_ref[...].astype(jnp.bfloat16),
        preferred_element_type=jnp.float32)

    @pl.when(pl.program_id(2) == pl.num_programs(2) - 1)
    def _():
        y = acc_ref[...] + b_ref[...].astype(jnp.float32)
        o_ref[...] = y.astype(o_ref.dtype)


def _matmul_residual_kernel(x_ref, w_ref, b_ref, r_ref, o_ref, acc_ref):
    """Tiled x @ w + b + residual (residual add fused into the matmul epilogue)."""
    @pl.when(pl.program_id(2) == 0)
    def _():
        acc_ref[...] = jnp.zeros_like(acc_ref)

    acc_ref[...] += jnp.dot(
        x_ref[...].astype(jnp.bfloat16),
        w_ref[...].astype(jnp.bfloat16),
        preferred_element_type=jnp.float32)

    @pl.when(pl.program_id(2) == pl.num_programs(2) - 1)
    def _():
        y = (acc_ref[...] + b_ref[...].astype(jnp.float32)
             + r_ref[...].astype(jnp.float32))
        o_ref[...] = y.astype(o_ref.dtype)


def _ln_matmul_kernel(x_ref, g_ref, bln_ref, w_ref, b_ref, o_ref, *, eps, gelu):
    """Fused LayerNorm (f32 stats) -> bf16 matmul -> bias (-> exact GELU)."""
    x = x_ref[...].astype(jnp.float32)
    mu = jnp.mean(x, axis=-1, keepdims=True)
    var = jnp.mean(jnp.square(x - mu), axis=-1, keepdims=True)
    h = (x - mu) * jax.lax.rsqrt(var + eps)
    h = h * g_ref[...].astype(jnp.float32) + bln_ref[...].astype(jnp.float32)

    y = jnp.dot(h.astype(jnp.bfloat16),
                w_ref[...].astype(jnp.bfloat16),
                preferred_element_type=jnp.float32)
    y = y + b_ref[...].astype(jnp.float32)
    if gelu:
        # exact GELU (erf form), matching torch.nn.GELU default
        y = 0.5 * y * (1.0 + jax.lax.erf(y * (1.0 / math.sqrt(2.0))))
    o_ref[...] = y.astype(o_ref.dtype)


def _layernorm_kernel(x_ref, g_ref, b_ref, o_ref, *, eps):
    x = x_ref[...].astype(jnp.float32)
    mu = jnp.mean(x, axis=-1, keepdims=True)
    var = jnp.mean(jnp.square(x - mu), axis=-1, keepdims=True)
    y = (x - mu) * jax.lax.rsqrt(var + eps)
    y = y * g_ref[...].astype(jnp.float32) + b_ref[...].astype(jnp.float32)
    o_ref[...] = y.astype(o_ref.dtype)


def _attention_kernel(qkv_ref, o_ref, *, heads, hd, scale):
    """Multi-head attention for one batch element, heads split inside the kernel.

    qkv_ref: (1, L, 3*dim) bf16 block with column layout [q_h0..q_hH, k_h0.., v_h0..]
    (matches the PyTorch qkv.reshape(B, L, 3, heads, hd) convention).
    """
    # TODO(synk): for long sequences (L >= ~1k) tile over KV blocks with an
    # online-softmax accumulator instead of materializing the full L x L scores.
    qkv = qkv_ref[0]                       # (L, 3*dim) bf16
    dim = heads * hd
    out_heads = []
    for h in range(heads):
        q = qkv[:, h * hd:(h + 1) * hd]
        k = qkv[:, dim + h * hd: dim + (h + 1) * hd]
        v = qkv[:, 2 * dim + h * hd: 2 * dim + (h + 1) * hd]
        # scores = q @ k^T * scale  (bf16 MXU operands, f32 accumulation)
        s = jax.lax.dot_general(q, k, (((1,), (1,)), ((), ())),
                                preferred_element_type=jnp.float32) * scale
        s = s - jnp.max(s, axis=-1, keepdims=True)
        p = jnp.exp(s)
        p = p * pl.reciprocal(jnp.sum(p, axis=-1, keepdims=True), approx=True)
        o = jnp.dot(p.astype(jnp.bfloat16), v.astype(jnp.bfloat16),
                    preferred_element_type=jnp.float32)
        out_heads.append(o)
    o_ref[0] = jnp.concatenate(out_heads, axis=-1).astype(o_ref.dtype)


# ----------------------------- kernel wrappers ------------------------------

def pallas_linear(x, w, b, residual=None, *, out_dtype=jnp.bfloat16,
                  tm_target=256, tn_target=256, tk_target=512):
    """Tiled x @ w + b (+ residual). x: (M, K), w: (K, N), b: (N,)."""
    M, K = x.shape
    Kw, N = w.shape
    assert K == Kw
    tm = M if M <= tm_target else tm_target
    Mp = _round_up(M, tm)
    tn = _pick_tile(N, tn_target)
    tk = _pick_tile(K, tk_target)
    if Mp != M:
        x = jnp.pad(x, ((0, Mp - M), (0, 0)))
        if residual is not None:
            residual = jnp.pad(residual, ((0, Mp - M), (0, 0)))

    in_specs = [pl.BlockSpec((tm, tk), lambda i, j, k: (i, k)),
                pl.BlockSpec((tk, tn), lambda i, j, k: (k, j)),
                pl.BlockSpec((1, tn), lambda i, j, k: (0, j))]
    args = [x, w, b.reshape(1, N)]
    if residual is None:
        kern = _matmul_kernel
    else:
        kern = _matmul_residual_kernel
        in_specs.append(pl.BlockSpec((tm, tn), lambda i, j, k: (i, j)))
        args.append(residual)

    out = pl.pallas_call(
        kern,
        out_shape=jax.ShapeDtypeStruct((Mp, N), out_dtype),
        grid=(Mp // tm, N // tn, K // tk),
        in_specs=in_specs,
        out_specs=pl.BlockSpec((tm, tn), lambda i, j, k: (i, j)),
        scratch_shapes=[pltpu.VMEM((tm, tn), jnp.float32)],
        compiler_params=pltpu.CompilerParams(
            dimension_semantics=("parallel", "parallel", "arbitrary"),
            vmem_limit_bytes=VMEM_LIMIT),
    )(*args)
    return out[:M] if Mp != M else out


def pallas_ln_linear(x, gamma, beta, w, b, *, gelu=False, eps=1e-6,
                     out_dtype=jnp.bfloat16, tm_target=256, tn_target=512):
    """Fused LayerNorm(x) @ w + b (optional GELU). LN over full K per row tile."""
    M, K = x.shape
    Kw, N = w.shape
    assert K == Kw
    tm = M if M <= tm_target else tm_target
    Mp = _round_up(M, tm)
    tn = _pick_tile(N, tn_target)
    if Mp != M:
        x = jnp.pad(x, ((0, Mp - M), (0, 0)))

    out = pl.pallas_call(
        functools.partial(_ln_matmul_kernel, eps=eps, gelu=gelu),
        out_shape=jax.ShapeDtypeStruct((Mp, N), out_dtype),
        grid=(Mp // tm, N // tn),
        in_specs=[pl.BlockSpec((tm, K), lambda i, j: (i, 0)),
                  pl.BlockSpec((1, K), lambda i, j: (0, 0)),
                  pl.BlockSpec((1, K), lambda i, j: (0, 0)),
                  pl.BlockSpec((K, tn), lambda i, j: (0, j)),
                  pl.BlockSpec((1, tn), lambda i, j: (0, j))],
        out_specs=pl.BlockSpec((tm, tn), lambda i, j: (i, j)),
        compiler_params=pltpu.CompilerParams(
            dimension_semantics=("parallel", "parallel"),
            vmem_limit_bytes=VMEM_LIMIT),
    )(x, gamma.reshape(1, K), beta.reshape(1, K), w, b.reshape(1, N))
    return out[:M] if Mp != M else out


def pallas_layernorm(x, gamma, beta, *, eps=1e-6, out_dtype=jnp.float32,
                     tm_target=512):
    """Standalone LayerNorm (used only for the final norm)."""
    M, D = x.shape
    tm = M if M <= tm_target else tm_target
    Mp = _round_up(M, tm)
    if Mp != M:
        x = jnp.pad(x, ((0, Mp - M), (0, 0)))
    out = pl.pallas_call(
        functools.partial(_layernorm_kernel, eps=eps),
        out_shape=jax.ShapeDtypeStruct((Mp, D), out_dtype),
        grid=(Mp // tm,),
        in_specs=[pl.BlockSpec((tm, D), lambda i: (i, 0)),
                  pl.BlockSpec((1, D), lambda i: (0, 0)),
                  pl.BlockSpec((1, D), lambda i: (0, 0))],
        out_specs=pl.BlockSpec((tm, D), lambda i: (i, 0)),
        compiler_params=pltpu.CompilerParams(
            dimension_semantics=("parallel",),
            vmem_limit_bytes=VMEM_LIMIT),
    )(x, gamma.reshape(1, D), beta.reshape(1, D))
    return out[:M] if Mp != M else out


def pallas_attention(qkv, *, heads, hd, scale):
    """qkv: (B, L, 3*dim) -> (B, L, dim). Heads are split inside the kernel."""
    B, L, three_dim = qkv.shape
    dim = heads * hd
    assert three_dim == 3 * dim
    return pl.pallas_call(
        functools.partial(_attention_kernel, heads=heads, hd=hd, scale=scale),
        out_shape=jax.ShapeDtypeStruct((B, L, dim), qkv.dtype),
        grid=(B,),
        in_specs=[pl.BlockSpec((1, L, three_dim), lambda b: (b, 0, 0))],
        out_specs=pl.BlockSpec((1, L, dim), lambda b: (b, 0, 0)),
        compiler_params=pltpu.CompilerParams(
            dimension_semantics=("parallel",),
            vmem_limit_bytes=VMEM_LIMIT),
    )(qkv)


# ------------------------------- model setup --------------------------------

def init_dino_params(key, *, in_chans, dim, depth, heads, mlp_ratio, num_tokens):
    """Deterministic synthetic ViT weights (same shapes as DINO vision_transformer).

    Matmul weights are stored in bfloat16 (MXU operands); biases / LN params /
    embeddings stay float32.
    """
    std = 0.02

    def normal(k, shape, dtype=jnp.float32):
        return (std * jax.random.normal(k, shape, dtype=jnp.float32)).astype(dtype)

    keys = iter(jax.random.split(key, 8 + depth * 8))
    p = {
        "patch_w": normal(next(keys), (in_chans * PATCH * PATCH, dim), jnp.bfloat16),
        "patch_b": jnp.zeros((dim,), jnp.float32),
        "cls_token": normal(next(keys), (1, 1, dim)),
        "pos_embed": normal(next(keys), (1, num_tokens, dim)),
        "norm_g": jnp.ones((dim,), jnp.float32),
        "norm_b": jnp.zeros((dim,), jnp.float32),
        "blocks": [],
    }
    hidden = dim * mlp_ratio
    for _ in range(depth):
        blk = {
            "ln1_g": jnp.ones((dim,), jnp.float32),
            "ln1_b": jnp.zeros((dim,), jnp.float32),
            "qkv_w": normal(next(keys), (dim, 3 * dim), jnp.bfloat16),
            "qkv_b": jnp.zeros((3 * dim,), jnp.float32),
            "proj_w": normal(next(keys), (dim, dim), jnp.bfloat16),
            "proj_b": jnp.zeros((dim,), jnp.float32),
            "ln2_g": jnp.ones((dim,), jnp.float32),
            "ln2_b": jnp.zeros((dim,), jnp.float32),
            "fc1_w": normal(next(keys), (dim, hidden), jnp.bfloat16),
            "fc1_b": jnp.zeros((hidden,), jnp.float32),
            "fc2_w": normal(next(keys), (hidden, dim), jnp.bfloat16),
            "fc2_b": jnp.zeros((dim,), jnp.float32),
        }
        p["blocks"].append(blk)
    return p


def multiplier_pad(x, mult=PATCH):
    """MultiplierPadding(16): zero-pad H, W (bottom/right) up to a multiple of 16."""
    # TODO(synk): exact padding placement/mode of MultiplierPadding is not in the
    # reference snippet; zero padding at bottom/right is assumed.
    B, C, H, W = x.shape
    ph = (-H) % mult
    pw = (-W) % mult
    return jnp.pad(x, ((0, 0), (0, 0), (0, ph), (0, pw)))


def dino_forward(params, x, *, heads, return_patch_token=False):
    """x: (B, C, H, W) float32, NCHW (PyTorch convention)."""
    x = multiplier_pad(x)
    B, C, H, W = x.shape
    Hp, Wp = H // PATCH, W // PATCH
    L = Hp * Wp + 1
    dim = params["patch_w"].shape[1]
    hd = dim // heads
    scale = hd ** (-0.5)

    # Patch embedding: 16x16/stride-16 conv == matmul over flattened patches
    # (flatten order (C, kh, kw) matches PyTorch conv weight flattening).
    patches = (x.reshape(B, C, Hp, PATCH, Wp, PATCH)
                .transpose(0, 2, 4, 1, 3, 5)
                .reshape(B * Hp * Wp, C * PATCH * PATCH)).astype(jnp.bfloat16)
    tok = pallas_linear(patches, params["patch_w"], params["patch_b"])
    tok = tok.reshape(B, Hp * Wp, dim)

    cls = jnp.broadcast_to(params["cls_token"], (B, 1, dim))
    # TODO(synk): DINO interpolates pos_embed for non-224 inputs; here pos_embed
    # is sized directly for this token count.
    x = jnp.concatenate([cls, tok.astype(jnp.float32)], axis=1) + params["pos_embed"]
    xf = x.astype(jnp.bfloat16).reshape(B * L, dim)          # bf16 residual stream

    for blk in params["blocks"]:
        # --- MHSA (pre-norm): LN fused into QKV matmul, residual fused into proj ---
        qkv = pallas_ln_linear(xf, blk["ln1_g"], blk["ln1_b"],
                               blk["qkv_w"], blk["qkv_b"])            # (B*L, 3*dim)
        attn = pallas_attention(qkv.reshape(B, L, 3 * dim),
                                heads=heads, hd=hd, scale=scale)      # (B, L, dim)
        xf = pallas_linear(attn.reshape(B * L, dim),
                           blk["proj_w"], blk["proj_b"], residual=xf)

        # --- MLP (pre-norm): LN+FC1+GELU fused, residual fused into FC2 ---
        h = pallas_ln_linear(xf, blk["ln2_g"], blk["ln2_b"],
                             blk["fc1_w"], blk["fc1_b"], gelu=True)
        xf = pallas_linear(h, blk["fc2_w"], blk["fc2_b"], residual=xf)

    x = pallas_layernorm(xf, params["norm_g"], params["norm_b"],
                         out_dtype=jnp.float32).reshape(B, L, dim)

    if not return_patch_token:
        return x[:, 0]                                   # (B, D) CLS features
    cls_token = x[:, 0]                                  # (B, D)
    patch_tok = x[:, 1:]                                 # (B, L-1, D)
    # rearrange 'b l d -> b d l ()'
    patch_tok = jnp.transpose(patch_tok, (0, 2, 1))[..., None]   # (B, D, L-1, 1)
    return cls_token, patch_tok


# ---------------------------------- main -------------------------------------

if __name__ == "__main__":
    # Small synthetic config consistent with the DINO ViT forward.
    B, C, H, W = 2, 3, 30, 30          # MultiplierPadding(16) -> 32x32 -> 2x2 patches
    DIM, DEPTH, HEADS, MLP_RATIO = 32, 2, 2, 4
    NUM_TOKENS = (32 // PATCH) * (32 // PATCH) + 1       # 4 patches + CLS = 5

    root = jax.random.PRNGKey(0)
    k_params, k_x = jax.random.split(root)
    params = init_dino_params(k_params, in_chans=C, dim=DIM, depth=DEPTH,
                              heads=HEADS, mlp_ratio=MLP_RATIO,
                              num_tokens=NUM_TOKENS)
    x = jax.random.normal(k_x, (B, C, H, W), dtype=jnp.float32)

    # Default path: CLS features.
    feats = dino_forward(params, x, heads=HEADS, return_patch_token=False)
    feats = jax.block_until_ready(feats)
    assert feats.shape == (B, DIM), feats.shape

    # Patch-token path.
    cls_tok, patch_tok = dino_forward(params, x, heads=HEADS,
                                      return_patch_token=True)
    cls_tok = jax.block_until_ready(cls_tok)
    patch_tok = jax.block_until_ready(patch_tok)
    assert cls_tok.shape == (B, DIM), cls_tok.shape
    assert patch_tok.shape == (B, DIM, NUM_TOKENS - 1, 1), patch_tok.shape

    print("KERNEL_OK")
</pallas_src>

<mosaic_0001>
module attributes {stable_mosaic.version = 11 : i64} {
  func.func @_matmul_kernel(%arg0: i32, %arg1: i32, %arg2: i32, %arg3: memref<8x384xbf16, #tpu.memory_space<vmem>>, %arg4: memref<384x32xbf16, #tpu.memory_space<vmem>>, %arg5: memref<1x32xf32, #tpu.memory_space<vmem>>, %arg6: memref<8x32xbf16, #tpu.memory_space<vmem>>, %arg7: memref<8x32xf32, #tpu.memory_space<vmem>>) attributes {dimension_semantics = [#tpu.dimension_semantics<parallel>, #tpu.dimension_semantics<parallel>, #tpu.dimension_semantics<arbitrary>], iteration_bounds = array<i64: 1, 1, 2>, scalar_prefetch = 0 : i64, scratch_operands = 1 : i64, tpu.core_type = #tpu.core_type<tc>, window_params = [{transform_indices = @transform_0, window_bounds = array<i64: 8, 384>}, {transform_indices = @transform_1, window_bounds = array<i64: 384, 32>}, {transform_indices = @transform_2, window_bounds = array<i64: 1, 32>}, {transform_indices = @transform_3, window_bounds = array<i64: 8, 32>}]} {
    %c0_i32 = arith.constant 0 : i32
    %0 = arith.cmpi eq, %arg2, %c0_i32 : i32
    %1 = arith.extui %0 : i1 to i32
    %c0_i32_0 = arith.constant 0 : i32
    %2 = arith.cmpi ne, %1, %c0_i32_0 : i32
    scf.if %2 {
      %cst_9 = arith.constant 0.000000e+00 : f32
      %12 = vector.broadcast %cst_9 : f32 to vector<8x32xf32>
      %c0_10 = arith.constant 0 : index
      %c0_11 = arith.constant 0 : index
      %13 = vector.load %arg7[%c0_10, %c0_11] : memref<8x32xf32, #tpu.memory_space<vmem>>, vector<8x32xf32>
      tpu.vector_store %arg7[%c0_10, %c0_11], %12 {strides = array<i32>} : memref<8x32xf32, #tpu.memory_space<vmem>>, vector<8x32xf32>,
    } else {
    }
    %c0 = arith.constant 0 : index
    %c0_1 = arith.constant 0 : index
    %3 = vector.load %arg7[%c0, %c0_1] : memref<8x32xf32, #tpu.memory_space<vmem>>, vector<8x32xf32>
    %c0_2 = arith.constant 0 : index
    %c0_3 = arith.constant 0 : index
    %4 = vector.load %arg3[%c0_2, %c0_3] : memref<8x384xbf16, #tpu.memory_space<vmem>>, vector<8x384xbf16>
    %c0_4 = arith.constant 0 : index
    %c0_5 = arith.constant 0 : index
    %5 = vector.load %arg4[%c0_4, %c0_5] : memref<384x32xbf16, #tpu.memory_space<vmem>>, vector<384x32xbf16>
    %cst = arith.constant dense<0.000000e+00> : vector<8x32xf32>
    %6 = tpu.matmul %4, %5, %cst {dimension_numbers = #tpu.dot_dimension_numbers<[1], [0], [0], [1], [0, 0, 1, 1], [], []>} : vector<8x384xbf16>, vector<384x32xbf16>, vector<8x32xf32> -> vector<8x32xf32>
    %7 = arith.addf %3, %6 : vector<8x32xf32>
    %c0_6 = arith.constant 0 : index
    %c0_7 = arith.constant 0 : index
    %8 = vector.load %arg7[%c0_6, %c0_7] : memref<8x32xf32, #tpu.memory_space<vmem>>, vector<8x32xf32>
    tpu.vector_store %arg7[%c0_6, %c0_7], %7 {strides = array<i32>} : memref<8x32xf32, #tpu.memory_space<vmem>>, vector<8x32xf32>,
    %c1_i32 = arith.constant 1 : i32
    %9 = arith.cmpi eq, %arg2, %c1_i32 : i32
    %10 = arith.extui %9 : i1 to i32
    %c0_i32_8 = arith.constant 0 : i32
    %11 = arith.cmpi ne, %10, %c0_i32_8 : i32
    scf.if %11 {
      %c0_9 = arith.constant 0 : index
      %c0_10 = arith.constant 0 : index
      %12 = vector.load %arg7[%c0_9, %c0_10] : memref<8x32xf32, #tpu.memory_space<vmem>>, vector<8x32xf32>
      %c0_11 = arith.constant 0 : index
      %c0_12 = arith.constant 0 : index
      %13 = vector.load %arg5[%c0_11, %c0_12] : memref<1x32xf32, #tpu.memory_space<vmem>>, vector<1x32xf32>
      %14 = vector.broadcast %13 : vector<1x32xf32> to vector<8x32xf32>
      %15 = arith.addf %12, %14 : vector<8x32xf32>
      %16 = arith.truncf %15 : vector<8x32xf32> to vector<8x32xbf16>
      %c0_13 = arith.constant 0 : index
      %c0_14 = arith.constant 0 : index
      %17 = vector.load %arg6[%c0_13, %c0_14] : memref<8x32xbf16, #tpu.memory_space<vmem>>, vector<8x32xbf16>
      tpu.vector_store %arg6[%c0_13, %c0_14], %16 {strides = array<i32>} : memref<8x32xbf16, #tpu.memory_space<vmem>>, vector<8x32xbf16>,
    } else {
    }
    return
  }
  func.func @transform_0(%arg0: i32, %arg1: i32, %arg2: i32) -> (i32, i32) {
    %c0_i32 = arith.constant 0 : i32
    return %arg0, %arg2 : i32, i32
  }
  func.func @transform_1(%arg0: i32, %arg1: i32, %arg2: i32) -> (i32, i32) {
    %c0_i32 = arith.constant 0 : i32
    return %arg2, %arg1 : i32, i32
  }
  func.func @transform_2(%arg0: i32, %arg1: i32, %arg2: i32) -> (i32, i32) {
    %c0_i32 = arith.constant 0 : i32
    %c0_i32_0 = arith.constant 0 : i32
    return %c0_i32, %arg1 : i32, i32
  }
  func.func @transform_3(%arg0: i32, %arg1: i32, %arg2: i32) -> (i32, i32) {
    %c0_i32 = arith.constant 0 : i32
    return %arg0, %arg1 : i32, i32
  }
}

</mosaic_0001>

<llo_original>
// kernel: tpu_custom_call.1
$region0: #{tpu_custom_call.1}
  #allocation0 [shape = 'u32[]', space=smem, size = 0x4, offset = 0x4, fixed_abs, tag = 'smem constant byte address 0x4 - core index']
  #allocation1 [shape = 'u32[144,128]{1,0:T(1,128)}', space=vmem, size = 0x12000, scoped, tag = 'internal scratch']
  #allocation2 [shape = 'f32[8,32]{1,0:T(8,128)}', space=vmem, size = 0x1000, scoped, tag = 'scratch operand']
  %s0 = inlined_call_operand.hbm [shape: bf16[8,768], index: 0, kind: input, shape index: {}]
  %s1 = inlined_call_operand.hbm [shape: bf16[768,32], index: 1, kind: input, shape index: {}]
  %s2 = inlined_call_operand.hbm [shape: f32[1,32], index: 2, kind: input, shape index: {}]
  %s3 = inlined_call_operand.hbm [shape: bf16[8,32], index: 3, kind: output, shape index: {}]
  %s4 = sld [smem:[#allocation0]]
  $region65: #{tpu_custom_call.1} parent=0
    _
  %s6 = ssub.s32 1, %s4
  %s7 = scalar_select 0, %s6, %s4
  $region1: #{tpu_custom_call.1} parent=0
    #allocation3 [shape = 'u8[12288]{0}', space=vmem, size = 0x3000, scoped, tag = 'input window, operand 0']
    #allocation4 [shape = 's32[2]{0}', space=sflag, size = 0x8, scoped, tag = 'scoped memory for tpu_custom_call.1']
    #allocation5 [shape = 's32[2]{0}', space=sflag, size = 0x8, scoped, tag = 'scoped memory for tpu_custom_call.1']
    #allocation6 [shape = 'u8[196608]{0}', space=vmem, size = 0x30000, scoped, tag = 'input window, operand 1']
    #allocation7 [shape = 's32[2]{0}', space=sflag, size = 0x8, scoped, tag = 'scoped memory for tpu_custom_call.1']
    #allocation8 [shape = 'u8[512]{0}', space=vmem, size = 0x400, scoped, tag = 'input window, operand 2, single buffered']
    #allocation9 [shape = 'u8[2048]{0}', space=vmem, size = 0x800, scoped, tag = 'output window, operand 0, single buffered']
    %8 = vsyncpa [#allocation4], 0
    %s9 = scalar_lea.sflag [#allocation4], 1
    %10 = vsyncpa %s9, 0
    %11 = vsyncpa [#allocation7], 0
    %s12 = scalar_lea.sflag [#allocation7], 1
    %13 = vsyncpa %s12, 0
    %14 = vsyncpa [#allocation5], 0
    loop: start=0, step=1, limit=4
    $region2: #{tpu_custom_call.1} parent=1 // loop_pre_header
      _
    $region3: #{tpu_custom_call.1} parent=1 // loop_header
      %s16 = sphi 0, %s20
      %p17 = scmp.ge.s32.totalorder %s16, 4
      %s23 = sphi 0, %s42
      %s24 = sphi 0, %s38
      %s25 = sphi 0, %s34
      %s26 = sphi 0, %s23
      %s27 = sphi 0, %s24
      %s28 = sphi 0, %s25
      %s29 = sphi 0, %s26
      %s30 = sphi 0, %s27
      %s31 = sphi 0, %s28
      %s47 = sphi 0, %s49
      %s50 = sphi 0, %s47
      %s51 = sphi 0, %s50
      %s67 = sphi 0, %s51
      %s75 = sphi 0, %s77
      %s78 = sphi 0, %s75
      %s79 = sphi 0, %s78
      %s95 = sphi 0, %s79
      %s101 = sphi 0, %s103
      %s104 = sphi 0, %s101
      %s105 = sphi 0, %s104
      %s121 = sphi 0, %s105
      %s129 = sphi 0, %s131
      %s132 = sphi 0, %s129
      %s133 = sphi 0, %s132
      %s149 = sphi 0, %s133
    $region4: #{tpu_custom_call.1} parent=1 // loop_header_branch
      %19 = sbr.rel (%p17) target = $region8
    $region5: #{tpu_custom_call.1} parent=1 // loop_body
      %s21 = ssub.s32 %s16, 1
      %s22 = ssub.s32 %s16, 2
      %s32 = sadd.s32 1, %s25
      %p33 = scmp.ge.s32.totalorder %s32, 2
      %s34 = scalar_select %p33, 0, %s32
      %s35 = sadd.s32 1, %s24
      %s36 = scalar_select %p33, %s35, %s24
      %p37 = scmp.ge.s32.totalorder %s36, 1
      %s38 = scalar_select %p37, 0, %s36
      %s39 = sadd.s32 1, %s23
      %s40 = scalar_select %p37, %s39, %s23
      %p41 = scmp.ge.s32.totalorder %s40, 1
      %s42 = scalar_select %p41, 0, %s40
      %s43 = ssub.s32 %s23, %s42
      %s44 = ssub.s32 %s25, %s34
      %s45 = sor.u32 %s43, %s44
      %p46 = scmp.eq.s32.totalorder %s45, 0
      %s48 = sadd.s32 %s47, 1
      %s49 = scalar_select %p46, %s47, %s48
      %p52 = pneg %p46
      %p53 = scmp.eq.s32.totalorder %s16, 1
      %p54 = por %p52, %p53
      %p55 = scmp.ne.s32.totalorder %s47, %s50
      %p56 = scmp.eq.s32.totalorder %s16, 0
      %p57 = por %p55, %p56
      %p58 = scmp.ne.s32.totalorder %s47, %s50
      %p59 = scmp.eq.s32.totalorder %s21, 1
      %p60 = por %p58, %p59
      %p61 = scmp.ne.s32.totalorder %s50, %s51
      %p62 = scmp.eq.s32.totalorder %s21, 0
      %p63 = por %p61, %p62
      %p64 = scmp.ne.s32.totalorder %s50, %s51
      %p65 = scmp.eq.s32.totalorder %s22, 1
      %p66 = por %p64, %p65
      %p68 = scmp.ne.s32.totalorder %s51, %s67
      %p69 = scmp.eq.s32.totalorder %s22, 0
      %p70 = por %p68, %p69
      %s71 = ssub.s32 %s25, %s34
      %s72 = ssub.s32 %s24, %s38
      %s73 = sor.u32 %s71, %s72
      %p74 = scmp.eq.s32.totalorder %s73, 0
      %s76 = sadd.s32 %s75, 1
      %s77 = scalar_select %p74, %s75, %s76
      %p80 = pneg %p74
      %p81 = scmp.eq.s32.totalorder %s16, 1
      %p82 = por %p80, %p81
      %p83 = scmp.ne.s32.totalorder %s75, %s78
      %p84 = scmp.eq.s32.totalorder %s16, 0
      %p85 = por %p83, %p84
      %p86 = scmp.ne.s32.totalorder %s75, %s78
      %p87 = scmp.eq.s32.totalorder %s21, 1
      %p88 = por %p86, %p87
      %p89 = scmp.ne.s32.totalorder %s78, %s79
      %p90 = scmp.eq.s32.totalorder %s21, 0
      %p91 = por %p89, %p90
      %p92 = scmp.ne.s32.totalorder %s78, %s79
      %p93 = scmp.eq.s32.totalorder %s22, 1
      %p94 = por %p92, %p93
      %p96 = scmp.ne.s32.totalorder %s79, %s95
      %p97 = scmp.eq.s32.totalorder %s22, 0
      %p98 = por %p96, %p97
      %s99 = ssub.s32 %s24, %s38
      %p100 = scmp.eq.s32.totalorder %s99, 0
      %s102 = sadd.s32 %s101, 1
      %s103 = scalar_select %p100, %s101, %s102
      %p106 = pneg %p100
      %p107 = scmp.eq.s32.totalorder %s16, 1
      %p108 = por %p106, %p107
      %p109 = scmp.ne.s32.totalorder %s101, %s104
      %p110 = scmp.eq.s32.totalorder %s16, 0
      %p111 = por %p109, %p110
      %p112 = scmp.ne.s32.totalorder %s101, %s104
      %p113 = scmp.eq.s32.totalorder %s21, 1
      %p114 = por %p112, %p113
      %p115 = scmp.ne.s32.totalorder %s104, %s105
      %p116 = scmp.eq.s32.totalorder %s21, 0
      %p117 = por %p115, %p116
      %p118 = scmp.ne.s32.totalorder %s104, %s105
      %p119 = scmp.eq.s32.totalorder %s22, 1
      %p120 = por %p118, %p119
      %p122 = scmp.ne.s32.totalorder %s105, %s121
      %p123 = scmp.eq.s32.totalorder %s22, 0
      %p124 = por %p122, %p123
      %s125 = ssub.s32 %s23, %s42
      %s126 = ssub.s32 %s24, %s38
      %s127 = sor.u32 %s125, %s126
      %p128 = scmp.eq.s32.totalorder %s127, 0
      %s130 = sadd.s32 %s129, 1
      %s131 = scalar_select %p128, %s129, %s130
      %p134 = pneg %p128
      %p135 = scmp.eq.s32.totalorder %s16, 1
      %p136 = por %p134, %p135
      %p137 = scmp.ne.s32.totalorder %s129, %s132
      %p138 = scmp.eq.s32.totalorder %s16, 0
      %p139 = por %p137, %p138
      %p140 = scmp.ne.s32.totalorder %s129, %s132
      %p141 = scmp.eq.s32.totalorder %s21, 1
      %p142 = por %p140, %p141
      %p143 = scmp.ne.s32.totalorder %s132, %s133
      %p144 = scmp.eq.s32.totalorder %s21, 0
      %p145 = por %p143, %p144
      %p146 = scmp.ne.s32.totalorder %s132, %s133
      %p147 = scmp.eq.s32.totalorder %s22, 1
      %p148 = por %p146, %p147
      %p150 = scmp.ne.s32.totalorder %s133, %s149
      %p151 = scmp.eq.s32.totalorder %s22, 0
      %p152 = por %p150, %p151
      %p153 = scmp.le.s32.totalorder 1, %s16
      %p154 = scmp.lt.s32.totalorder %s16, 3
      %p155 = pnand %p153, %p154
      %p156 = pneg %p155
      // Predicated region
      $region9: #{tpu_custom_call.1} parent=5 // pred_check
        _
      $region10: #{tpu_custom_call.1} parent=5 // pred_check_branch
        %158 = sbr.rel (%p155) target = $region12
      $region11: #{tpu_custom_call.1} parent=5 // pred_region
        %s159 = ssub.s32 %s16, 1
        // Predicated region
        $region13: #{tpu_custom_call.1} parent=11 // pred_check
          %p160 = pneg %p117
        $region14: #{tpu_custom_call.1} parent=11 // pred_check_branch
          %162 = sbr.rel (%p160) target = $region16
        $region15: #{tpu_custom_call.1} parent=11 // pred_region
          %s164 = ssub.s32 16, 16
          %165 = vsyncadd [#allocation7], %s164
          %s166 = smul.addr %s27, 16
          %s167 = scalar_lea.hbm %s2, %s166
          %s169 = sshll.u32 [#allocation8], 4
          %s170 = int_to_ptr.vmem [resolvable:$true] %s169
          %172 = dma.hbm_to_vmem [thread:$0]  %s167, 16, %s170, [#allocation7]
        $region16: #{tpu_custom_call.1} parent=11 // pred_fallthru
          _
      $region12: #{tpu_custom_call.1} parent=5 // pred_fallthru
        _
      %p173 = scmp.lt.s32.totalorder %s16, 2
      // Predicated region
      $region17: #{tpu_custom_call.1} parent=5 // pred_check
        %p174 = pneg %p173
      $region18: #{tpu_custom_call.1} parent=5 // pred_check_branch
        %176 = sbr.rel (%p174) target = $region20
      $region19: #{tpu_custom_call.1} parent=5 // pred_region
        // Predicated region
        $region21: #{tpu_custom_call.1} parent=19 // pred_check
          %p177 = pneg %p57
        $region22: #{tpu_custom_call.1} parent=19 // pred_check_branch
          %179 = sbr.rel (%p177) target = $region24
        $region23: #{tpu_custom_call.1} parent=19 // pred_region
          %s180 = sand.u32 %s47, 1
          %s181 = scalar_lea.sflag [#allocation4], %s180
          %s182 = sand.u32 %s47, 1
          %s183 = smul.addr %s182, 12
          %s184 = scalar_lea.vmem [#allocation3], %s183
          %s185 = smul.u32 3, %s25
          %s187 = ssub.s32 192, 192
          %188 = vsyncadd %s181, %s187
          %s189 = smul.addr %s23, 6
          %s190 = sadd.s32 %s185, %s189
          %s191 = smul.addr %s190, 64
          %s192 = scalar_lea.hbm %s0, %s191
          %s194 = sshll.u32 %s184, 4
          %s195 = int_to_ptr.vmem [resolvable:$true] %s194
          %197 = dma.hbm_to_vmem [thread:$0]  %s192, 192, %s195, %s181
        $region24: #{tpu_custom_call.1} parent=19 // pred_fallthru
          _
        // Predicated region
        $region25: #{tpu_custom_call.1} parent=19 // pred_check
          %p198 = pneg %p85
        $region26: #{tpu_custom_call.1} parent=19 // pred_check_branch
          %200 = sbr.rel (%p198) target = $region28
        $region27: #{tpu_custom_call.1} parent=19 // pred_region
          %s201 = sand.u32 %s16, 1
          %s202 = scalar_lea.sflag [#allocation7], %s201
          %s203 = sand.u32 %s75, 1
          %s204 = smul.addr %s203, 192
          %s205 = scalar_lea.vmem [#allocation6], %s204
          %s206 = smul.u32 48, %s25
          %s208 = ssub.s32 3072, 3072
          %209 = vsyncadd %s202, %s208
          %s210 = sadd.s32 %s24, %s206
          %s211 = smul.addr %s210, 64
          %s212 = scalar_lea.hbm %s1, %s211
          %s213 = sshll.u32 %s205, 4
          %s214 = int_to_ptr.vmem [resolvable:$true] %s213
          %219 = dma.hbm_to_vmem [thread:$0]  %s212, 3072, %s214, %s202, 64, 64, 4
        $region28: #{tpu_custom_call.1} parent=19 // pred_fallthru
          _
      $region20: #{tpu_custom_call.1} parent=5 // pred_fallthru
        _
      %p220 = scmp.le.s32.totalorder 1, %s16
      %p221 = scmp.lt.s32.totalorder %s16, 3
      %p222 = pnand %p220, %p221
      %p223 = pneg %p222
      // Predicated region
      $region29: #{tpu_custom_call.1} parent=5 // pred_check
        _
      $region30: #{tpu_custom_call.1} parent=5 // pred_check_branch
        %225 = sbr.rel (%p222) target = $region32
      $region31: #{tpu_custom_call.1} parent=5 // pred_region
        %s226 = ssub.s32 %s16, 1
        %s227 = sand.u32 %s50, 1
        %s228 = scalar_lea.sflag [#allocation4], %s227
        %s229 = sand.u32 %s50, 1
        %s230 = smul.addr %s229, 12
        %s231 = scalar_lea.vmem [#allocation3], %s230
        // Predicated region
        $region33: #{tpu_custom_call.1} parent=31 // pred_check
          %p232 = pneg %p63
        $region34: #{tpu_custom_call.1} parent=31 // pred_check_branch
          %234 = sbr.rel (%p232) target = $region36
        $region35: #{tpu_custom_call.1} parent=31 // pred_region
          %235 = dma.done %s228, 192
        $region36: #{tpu_custom_call.1} parent=31 // pred_fallthru
          _
        %s236 = sand.u32 %s21, 1
        %s237 = scalar_lea.sflag [#allocation7], %s236
        %s238 = sand.u32 %s78, 1
        %s239 = smul.addr %s238, 192
        %s240 = scalar_lea.vmem [#allocation6], %s239
        // Predicated region
        $region37: #{tpu_custom_call.1} parent=31 // pred_check
          %p241 = pneg %p91
        $region38: #{tpu_custom_call.1} parent=31 // pred_check_branch
          %243 = sbr.rel (%p241) target = $region40
        $region39: #{tpu_custom_call.1} parent=31 // pred_region
          %244 = dma.done %s237, 3072
        $region40: #{tpu_custom_call.1} parent=31 // pred_fallthru
          _
        // Predicated region
        $region41: #{tpu_custom_call.1} parent=31 // pred_check
          %p245 = pneg %p117
        $region42: #{tpu_custom_call.1} parent=31 // pred_check_branch
          %247 = sbr.rel (%p245) target = $region44
        $region43: #{tpu_custom_call.1} parent=31 // pred_region
          %248 = dma.done [#allocation7], 16
        $region44: #{tpu_custom_call.1} parent=31 // pred_fallthru
          _
        %s249 = sand.u32 %s50, 1
        %s250 = scalar_lea.sflag [#allocation4], %s249
        %s251 = sand.u32 %s50, 1
        %s252 = smul.addr %s251, 12
        %s253 = scalar_lea.vmem [#allocation3], %s252
        %p254 = pneg %p63
        %p255 = pneg %p60
        %s256 = sand.u32 %s21, 1
        %s257 = scalar_lea.sflag [#allocation7], %s256
        %s258 = sand.u32 %s78, 1
        %s259 = smul.addr %s258, 192
        %s260 = scalar_lea.vmem [#allocation6], %s259
        %p261 = pneg %p91
        %p262 = pneg %p88
        %p263 = pneg %p117
        %p264 = pneg %p114
        %p265 = pneg %p145
        %p266 = pneg %p142
        %s267 = smul.u32 3, %s28
        %s268 = smul.u32 48, %s28
        %p270 = scmp.eq.s32.totalorder %s28, 0
        // Predicated region
        $region45: #{tpu_custom_call.1} parent=31 // pred_check
          %p271 = pneg %p270
        $region46: #{tpu_custom_call.1} parent=31 // pred_check_branch
          %273 = sbr.rel (%p271) target = $region48
        $region47: #{tpu_custom_call.1} parent=31 // pred_region
          %vm274 = vcmask 261120
          %275 = vst.msk [vmem:[#allocation2] sm:$0xff] %vm274, 0.0
        $region48: #{tpu_custom_call.1} parent=31 // pred_fallthru
          _
        %v276 = vld [vmem:[#allocation2] sm:$0xff]
        %v277 = vld [vmem:[%s231] sm:$0xff]
        %v278 = vld [vmem:[%s231 + $0x8] sm:$0xf]
        %v279 = vld [vmem:[%s240] sm:$0xf]
        %v280 = vld [vmem:[%s240 + $0x4] sm:$0xf]
        %v281 = vld [vmem:[%s240 + $0x8] sm:$0xf]
        %v282 = vld [vmem:[%s240 + $0xc] sm:$0xf]
        %v283 = vld [vmem:[%s240 + $0x10] sm:$0xf]
        %v284 = vld [vmem:[%s240 + $0x14] sm:$0xf]
        %v285 = vld [vmem:[%s240 + $0x18] sm:$0xf]
        %v286 = vld [vmem:[%s240 + $0x1c] sm:$0xf]
        %v287 = vld [vmem:[%s240 + $0x20] sm:$0xf]
        %v288 = vld [vmem:[%s240 + $0x24] sm:$0xf]
        %v289 = vld [vmem:[%s240 + $0x28] sm:$0xf]
        %v290 = vld [vmem:[%s240 + $0x2c] sm:$0xf]
        %v291 = vld [vmem:[%s240 + $0x30] sm:$0xf]
        %v292 = vld [vmem:[%s240 + $0x34] sm:$0xf]
        %v293 = vld [vmem:[%s240 + $0x38] sm:$0xf]
        %v294 = vld [vmem:[%s240 + $0x3c] sm:$0xf]
        %v295 = vld [vmem:[%s240 + $0x40] sm:$0xf]
        %v296 = vld [vmem:[%s240 + $0x44] sm:$0xf]
        %v297 = vld [vmem:[%s240 + $0x48] sm:$0xf]
        %v298 = vld [vmem:[%s240 + $0x4c] sm:$0xf]
        %v299 = vld [vmem:[%s240 + $0x50] sm:$0xf]
        %v300 = vld [vmem:[%s240 + $0x54] sm:$0xf]
        %v301 = vld [vmem:[%s240 + $0x58] sm:$0xf]
        %v302 = vld [vmem:[%s240 + $0x5c] sm:$0xf]
        %v303 = vld [vmem:[%s240 + $0x60] sm:$0xf]
        %v304 = vld [vmem:[%s240 + $0x64] sm:$0xf]
        %v305 = vld [vmem:[%s240 + $0x68] sm:$0xf]
        %v306 = vld [vmem:[%s240 + $0x6c] sm:$0xf]
        %v307 = vld [vmem:[%s240 + $0x70] sm:$0xf]
        %v308 = vld [vmem:[%s240 + $0x74] sm:$0xf]
        %v309 = vld [vmem:[%s240 + $0x78] sm:$0xf]
        %v310 = vld [vmem:[%s240 + $0x7c] sm:$0xf]
        %v311 = vld [vmem:[%s240 + $0x80] sm:$0xf]
        %v312 = vld [vmem:[%s240 + $0x84] sm:$0xf]
        %v313 = vld [vmem:[%s240 + $0x88] sm:$0xf]
        %v314 = vld [vmem:[%s240 + $0x8c] sm:$0xf]
        %v315 = vld [vmem:[%s240 + $0x90] sm:$0xf]
        %v316 = vld [vmem:[%s240 + $0x94] sm:$0xf]
        %v317 = vld [vmem:[%s240 + $0x98] sm:$0xf]
        %v318 = vld [vmem:[%s240 + $0x9c] sm:$0xf]
        %v319 = vld [vmem:[%s240 + $0xa0] sm:$0xf]
        %v320 = vld [vmem:[%s240 + $0xa4] sm:$0xf]
        %v321 = vld [vmem:[%s240 + $0xa8] sm:$0xf]
        %v322 = vld [vmem:[%s240 + $0xac] sm:$0xf]
        %v323 = vld [vmem:[%s240 + $0xb0] sm:$0xf]
        %v324 = vld [vmem:[%s240 + $0xb4] sm:$0xf]
        %v325 = vld [vmem:[%s240 + $0xb8] sm:$0xf]
        %v326 = vld [vmem:[%s240 + $0xbc] sm:$0xf]
        %v329 = vunpack.c.l.b16 %v277
        %v330 = vunpack.c.h.b16 %v277
        %v331 = vunpack.c.l.b16 %v278
        %v332 = vpack.c.b16 %v329, %v329
        %v333 = vpack.c.b16 %v330, %v330
        %v334 = vpack.c.b16 %v331, %v331
        %v386 = vunpack.c.l.b16 %v279
        %v387 = vunpack.c.l.b16 %v280
        %v388 = vunpack.c.l.b16 %v281
        %v389 = vunpack.c.l.b16 %v282
        %v390 = vunpack.c.l.b16 %v283
        %v391 = vunpack.c.l.b16 %v284
        %v392 = vunpack.c.l.b16 %v285
        %v393 = vunpack.c.l.b16 %v286
        %v394 = vunpack.c.l.b16 %v287
        %v395 = vunpack.c.l.b16 %v288
        %v396 = vunpack.c.l.b16 %v289
        %v397 = vunpack.c.l.b16 %v290
        %v398 = vunpack.c.l.b16 %v291
        %v399 = vunpack.c.l.b16 %v292
        %v400 = vunpack.c.l.b16 %v293
        %v401 = vunpack.c.l.b16 %v294
        %v402 = vunpack.c.l.b16 %v295
        %v403 = vunpack.c.l.b16 %v296
        %v404 = vunpack.c.l.b16 %v297
        %v405 = vunpack.c.l.b16 %v298
        %v406 = vunpack.c.l.b16 %v299
        %v407 = vunpack.c.l.b16 %v300
        %v408 = vunpack.c.l.b16 %v301
        %v409 = vunpack.c.l.b16 %v302
        %v410 = vunpack.c.l.b16 %v303
        %v411 = vunpack.c.l.b16 %v304
        %v412 = vunpack.c.l.b16 %v305
        %v413 = vunpack.c.l.b16 %v306
        %v414 = vunpack.c.l.b16 %v307
        %v415 = vunpack.c.l.b16 %v308
        %v416 = vunpack.c.l.b16 %v309
        %v417 = vunpack.c.l.b16 %v310
        %v418 = vunpack.c.l.b16 %v311
        %v419 = vunpack.c.l.b16 %v312
        %v420 = vunpack.c.l.b16 %v313
        %v421 = vunpack.c.l.b16 %v314
        %v422 = vunpack.c.l.b16 %v315
        %v423 = vunpack.c.l.b16 %v316
        %v424 = vunpack.c.l.b16 %v317
        %v425 = vunpack.c.l.b16 %v318
        %v426 = vunpack.c.l.b16 %v319
        %v427 = vunpack.c.l.b16 %v320
        %v428 = vunpack.c.l.b16 %v321
        %v429 = vunpack.c.l.b16 %v322
        %v430 = vunpack.c.l.b16 %v323
        %v431 = vunpack.c.l.b16 %v324
        %v432 = vunpack.c.l.b16 %v325
        %v433 = vunpack.c.l.b16 %v326
        %v434 = vpack.c.b16 %v387, %v386
        %v435 = vpack.c.b16 %v389, %v388
        %v436 = vpack.c.b16 %v391, %v390
        %v437 = vpack.c.b16 %v393, %v392
        %v438 = vpack.c.b16 %v395, %v394
        %v439 = vpack.c.b16 %v397, %v396
        %v440 = vpack.c.b16 %v399, %v398
        %v441 = vpack.c.b16 %v401, %v400
        %v442 = vpack.c.b16 %v403, %v402
        %v443 = vpack.c.b16 %v405, %v404
        %v444 = vpack.c.b16 %v407, %v406
        %v445 = vpack.c.b16 %v409, %v408
        %v446 = vpack.c.b16 %v411, %v410
        %v447 = vpack.c.b16 %v413, %v412
        %v448 = vpack.c.b16 %v415, %v414
        %v449 = vpack.c.b16 %v417, %v416
        %v450 = vpack.c.b16 %v419, %v418
        %v451 = vpack.c.b16 %v421, %v420
        %v452 = vpack.c.b16 %v423, %v422
        %v453 = vpack.c.b16 %v425, %v424
        %v454 = vpack.c.b16 %v427, %v426
        %v455 = vpack.c.b16 %v429, %v428
        %v456 = vpack.c.b16 %v431, %v430
        %v457 = vpack.c.b16 %v433, %v432
        %482 = vmatprep.subr.bf16.mxu0 0
        %483 = vmatpush1.bf16.msra.mxu0 %v434
        %484 = vmatprep.subr.bf16.mxu0 0
        %485 = vmatpush1.bf16.msra.mxu0 %v435
        %486 = vmatprep.subr.bf16.mxu0 0
        %487 = vmatpush1.bf16.msra.mxu0 %v436
        %488 = vmatprep.subr.bf16.mxu0 0
        %489 = vmatpush1.bf16.msra.mxu0 %v437
        %490 = vmatprep.subr.bf16.mxu0 0
        %491 = vmatpush1.bf16.msra.mxu0 %v438
        %492 = vmatprep.subr.bf16.mxu0 0
        %493 = vmatpush1.bf16.msra.mxu0 %v439
        %494 = vmatprep.subr.bf16.mxu0 0
        %495 = vmatpush1.bf16.msra.mxu0 %v440
        %496 = vmatprep.subr.bf16.mxu0 0
        %497 = vmatpush1.bf16.msra.mxu0 %v441
        %498 = vmatprep.subr.bf16.mxu0 0
        %499 = vmatpush1.bf16.msra.mxu0 %v442
        %500 = vmatprep.subr.bf16.mxu0 0
        %501 = vmatpush1.bf16.msra.mxu0 %v443
        %502 = vmatprep.subr.bf16.mxu0 0
        %503 = vmatpush1.bf16.msra.mxu0 %v444
        %504 = vmatprep.subr.bf16.mxu0 0
        %505 = vmatpush1.bf16.msra.mxu0 %v445
        %506 = vmatprep.subr.bf16.mxu0 0
        %507 = vmatpush1.bf16.msra.mxu0 %v446
        %508 = vmatprep.subr.bf16.mxu0 0
        %509 = vmatpush1.bf16.msra.mxu0 %v447
        %510 = vmatprep.subr.bf16.mxu0 0
        %511 = vmatpush1.bf16.msra.mxu0 %v448
        %512 = vmatprep.subr.bf16.mxu0 0
        %513 = vmatpush1.bf16.msra.mxu0 %v449
        %514 = vmatprep.mubr.bf16.mxu0 %v333
        %515 = vmatmul.mubr.bf16.gmra.mrb[0].mxu0 %v332
        %v516 = vpop.f32.mrb[0].mxu0
        %v517 = vadd.f32 0.0, %v516
        %v518 = vpop.f32.mrb[0].mxu0
        %v519 = vpop.f32.mrb[0].mxu0
        %v520 = vpop.f32.mrb[0].mxu0
        %521 = vdwg.mxu0
        %522 = vmatprep.subr.bf16.mxu0 0
        %523 = vmatpush1.bf16.msra.mxu0 %v450
        %524 = vmatprep.subr.bf16.mxu0 0
        %525 = vmatpush1.bf16.msra.mxu0 %v451
        %526 = vmatprep.subr.bf16.mxu0 0
        %527 = vmatpush1.bf16.msra.mxu0 %v452
        %528 = vmatprep.subr.bf16.mxu0 0
        %529 = vmatpush1.bf16.msra.mxu0 %v453
        %530 = vmatprep.subr.bf16.mxu0 0
        %531 = vmatpush1.bf16.msra.mxu0 %v454
        %532 = vmatprep.subr.bf16.mxu0 0
        %533 = vmatpush1.bf16.msra.mxu0 %v455
        %534 = vmatprep.subr.bf16.mxu0 0
        %535 = vmatpush1.bf16.msra.mxu0 %v456
        %536 = vmatprep.subr.bf16.mxu0 0
        %537 = vmatpush1.bf16.msra.mxu0 %v457
        %538 = vmatprep.subr.bf16.mxu0 0
        %539 = vmatpush1.bf16.msra.mxu0 0
        %540 = vmatprep.subr.bf16.mxu0 0
        %541 = vmatpush1.bf16.msra.mxu0 0
        %542 = vmatprep.subr.bf16.mxu0 0
        %543 = vmatpush1.bf16.msra.mxu0 0
        %544 = vmatprep.subr.bf16.mxu0 0
        %545 = vmatpush1.bf16.msra.mxu0 0
        %546 = vmatprep.subr.bf16.mxu0 0
        %547 = vmatpush1.bf16.msra.mxu0 0
        %548 = vmatprep.subr.bf16.mxu0 0
        %549 = vmatpush1.bf16.msra.mxu0 0
        %550 = vmatprep.subr.bf16.mxu0 0
        %551 = vmatpush1.bf16.msra.mxu0 0
        %552 = vmatprep.subr.bf16.mxu0 0
        %553 = vmatpush1.bf16.msra.mxu0 0
        %554 = vmatprep.mubr.bf16.mxu0 0
        %555 = vmatmul.mubr.bf16.gmra.mrb[0].mxu0 %v334
        %v556 = vpop.f32.mrb[0].mxu0
        %v557 = vadd.f32 %v517, %v556
        %v558 = vpop.f32.mrb[0].mxu0
        %v559 = vpop.f32.mrb[0].mxu0
        %v560 = vpop.f32.mrb[0].mxu0
        %561 = vdwg.mxu0
        %v562 = vadd.f32 %v276, %v557
        %vm563 = vcmask 261120
        %564 = vst.msk [vmem:[#allocation2] sm:$0xff] %vm563, %v562
        %p565 = scmp.eq.s32.totalorder %s28, 1
        // Predicated region
        $region49: #{tpu_custom_call.1} parent=31 // pred_check
          %p566 = pneg %p565
        $region50: #{tpu_custom_call.1} parent=31 // pred_check_branch
          %568 = sbr.rel (%p566) target = $region52
        $region51: #{tpu_custom_call.1} parent=31 // pred_region
          %v569 = vld [vmem:[#allocation2] sm:$0xff]
          %v570 = vld [vmem:[#allocation8] sm:$0x1]
          %v572 = vlaneseq
          %v573 = vshrl.u32 %v572, 7
          %v574 = vsub.s32 0, %v573
          %v575 = vrot.slane %v570, %v574
          %v577 = vadd.f32 %v569, %v575
          %v578 = vpack.c.bf16 %v577, %v577
          %vm579 = vcmask 257024
          %580 = vst.msk [vmem:[#allocation9] sm:$0xf] %vm579, %v578
        $region52: #{tpu_custom_call.1} parent=31 // pred_fallthru
          _
        // Predicated region
        $region53: #{tpu_custom_call.1} parent=31 // pred_check
          %p581 = pneg %p142
        $region54: #{tpu_custom_call.1} parent=31 // pred_check_branch
          %583 = sbr.rel (%p581) target = $region56
        $region55: #{tpu_custom_call.1} parent=31 // pred_region
          %s585 = ssub.s32 64, 64
          %586 = vsyncadd [#allocation5], %s585
          %s587 = sadd.s32 %s27, %s26
          %s588 = smul.addr %s587, 64
          %s589 = scalar_lea.hbm %s3, %s588
          %s591 = sshll.u32 [#allocation9], 4
          %s592 = int_to_ptr.vmem [resolvable:$true] %s591
          %594 = dma.vmem_to_hbm [thread:$0]  %s592, 64, %s589, [#allocation5]
        $region56: #{tpu_custom_call.1} parent=31 // pred_fallthru
          _
        // Predicated region
        $region57: #{tpu_custom_call.1} parent=31 // pred_check
          %p595 = pneg %p142
        $region58: #{tpu_custom_call.1} parent=31 // pred_check_branch
          %597 = sbr.rel (%p595) target = $region60
        $region59: #{tpu_custom_call.1} parent=31 // pred_region
          %598 = dma.done [#allocation5], 64
        $region60: #{tpu_custom_call.1} parent=31 // pred_fallthru
          _
      $region32: #{tpu_custom_call.1} parent=5 // pred_fallthru
        _
      %p599 = scmp.le.s32.totalorder 2, %s16
      // Predicated region
      $region61: #{tpu_custom_call.1} parent=5 // pred_check
        %p600 = pneg %p599
      $region62: #{tpu_custom_call.1} parent=5 // pred_check_branch
        %602 = sbr.rel (%p600) target = $region64
      $region63: #{tpu_custom_call.1} parent=5 // pred_region
        %s603 = ssub.s32 %s16, 2
      $region64: #{tpu_custom_call.1} parent=5 // pred_fallthru
        _
    $region6: #{tpu_custom_call.1} parent=1 // loop_footer
      %s20 = sadd.s32 1, %s16
    $region7: #{tpu_custom_call.1} parent=1 // loop_footer_branch
      %15 = sbr.rel target = $region3
    $region8: #{tpu_custom_call.1} parent=1 // loop_exit
      _
    %604 = vsyncpa [#allocation4], 1
    %s605 = scalar_lea.sflag [#allocation4], 1
    %606 = vsyncpa %s605, 1
    %607 = vsyncpa [#allocation7], 1
    %s608 = scalar_lea.sflag [#allocation7], 1
    %609 = vsyncpa %s608, 1
    %610 = vsyncpa [#allocation5], 1
    %s611 = scalar_lea.sflag [#allocation5], 1
    %612 = vsyncpa %s611, 1

</llo_original>
